<compile_context>
chip_gen: v5e
topology: v5e:2x2
jax: 0.10.0
libtpu: 0.0.40
codegen_flags: <defaults>
</compile_context>

<pallas_src>
import functools
import math

import numpy as np

import jax
import jax.numpy as jnp
from jax import lax
from jax.experimental import pallas as pl
from jax.experimental.pallas import tpu as pltpu

SIGMA = 4
KSIZE = 2 * int(4.0 * SIGMA + 0.5) + 1      # 33
PAD = (KSIZE - 1) // 2                       # 16

_LANE = 128
_SUBLANE = 8


def _gaussian_kernel1d(ksize: int, sigma: float) -> list:
    """Kornia-style normalized 1-D Gaussian (compile-time Python floats)."""
    center = ksize // 2
    xs = [i - center for i in range(ksize)]
    g = [math.exp(-(x * x) / (2.0 * sigma * sigma)) for x in xs]
    s = sum(g)
    return [v / s for v in g]


_G1D = _gaussian_kernel1d(KSIZE, float(SIGMA))


def _round_up(x: int, m: int) -> int:
    return ((x + m - 1) // m) * m


@functools.lru_cache(maxsize=None)
def _band_matrix(out_size: int, in_size: int) -> np.ndarray:
    """(out_size, in_size) operator fusing, along one axis:
    nearest upsample (in_size -> out_size), reflect pad by PAD, 1-D Gaussian blur.
    Accumulated in float64, returned as float32 (rows sum to 1)."""
    m = np.zeros((out_size, in_size), dtype=np.float64)
    for o in range(out_size):
        for t in range(KSIZE):
            q = o + t - PAD                    # index into the virtual upsampled axis
            if q < 0:                          # reflect (no edge repeat), as F.pad('reflect')
                q = -q
            elif q > out_size - 1:
                q = 2 * (out_size - 1) - q
            src = (q * in_size) // out_size    # PyTorch 'nearest' source index
            m[o, src] += _G1D[t]
    return np.ascontiguousarray(m, dtype=np.float32)


def _vmem_capacity_bytes() -> int:
    try:
        return int(pltpu.get_tpu_info().vmem_capacity_bytes)
    except Exception:
        return 64 << 20                        # conservative fallback (v7x per-core)


def _block_spec(block_shape, index_map, *, single_buffer: bool = False) -> pl.BlockSpec:
    """BlockSpec; single_buffer=True requests Buffered(1) for blocks whose index
    map is constant over the whole grid (halves their resident VMEM footprint)."""
    if single_buffer and hasattr(pl, "Buffered"):
        try:
            return pl.BlockSpec(block_shape, index_map, pipeline_mode=pl.Buffered(1))
        except TypeError:                      # pipeline_mode unsupported -> default
            pass
    return pl.BlockSpec(block_shape, index_map)


def _choose_tiles(bsz: int, h_in: int, w_in: int, out_h: int, out_w: int,
                  vmem_budget: int):
    """Pick (batch_block, row_tile) so the double-buffered output block stays under
    ~1/4 of the VMEM budget, and guarantee >=2 parallel grid steps when possible
    (keeps both v7x TensorCores busy even for single-image inference)."""
    out_block_budget = max(vmem_budget // 4, 1 << 20)

    def out_block_bytes(bb, rt):
        # double-buffered f32 output block; last dim pads to lane multiples in VMEM
        return 2 * bb * rt * _round_up(out_w, _LANE) * 4

    # Row tile must be a multiple of 8 (sublane constraint) OR the full height.
    if out_h % _SUBLANE == 0:
        row_tiles = [d for d in range(_SUBLANE, out_h + 1, _SUBLANE) if out_h % d == 0]
    else:
        row_tiles = [out_h]
    batch_blocks = [d for d in range(1, min(bsz, 8) + 1) if bsz % d == 0]

    bb = batch_blocks[-1]

    def pick_rt(bb_):
        for cand in sorted(row_tiles, reverse=True):
            if out_block_bytes(bb_, cand) <= out_block_budget:
                return cand
        return None

    rt = pick_rt(bb)
    while rt is None and bb > 1:
        bb = max(d for d in batch_blocks if d < bb)
        rt = pick_rt(bb)
    if rt is None:
        # TODO(synk): tile the W (lane) axis as well for extremely wide/odd outputs.
        bb, rt = 1, min(row_tiles)

    # Guarantee >=2 grid steps on the parallel axes (v7x has 2 TensorCores).
    if (bsz // bb) * (out_h // rt) < 2:
        smaller_rows = [d for d in row_tiles if d < rt]
        if smaller_rows:
            rt = max(smaller_rows)             # split rows (no redundant work, see kernel)
        elif bsz >= 2:
            bb = max(d for d in batch_blocks if d < bb)
    return bb, rt


def _anomaly_kernel(a_ref, bmat_ref, x_ref, o_ref):
    """out[b] = A_tile @ x[b] @ Bm, computed vertical-pass-first.

    a_ref    : (RT, h_in)          vertical operator row tile
    bmat_ref : (w_in, out_w)       horizontal operator (resident, single-buffered)
    x_ref    : (BB, 1, h_in, w_in) patch-score block
    o_ref    : (BB, 1, RT, out_w)  output block (exact shape, lane tail masked)

    Vertical pass first => every FLOP is unique to this (batch, row-tile) block,
    so nothing is recomputed across row tiles and both grid axes stay "parallel".
    """
    a = a_ref[...]
    bmat = bmat_ref[...]
    for b in range(x_ref.shape[0]):            # static unroll over the batch block
        u = jnp.dot(a, x_ref[b, 0],
                    preferred_element_type=jnp.float32,
                    precision=lax.Precision.HIGHEST)           # (RT, w_in)
        o_ref[b, 0] = jnp.dot(u, bmat,
                              preferred_element_type=jnp.float32,
                              precision=lax.Precision.HIGHEST)  # (RT, out_w)


@functools.lru_cache(maxsize=None)
def _build_generator(bsz: int, h_in: int, w_in: int, out_h: int, out_w: int):
    """Build (once per shape) the band matrices + jitted pallas_call wrapper."""
    a_np = _band_matrix(out_h, h_in)                                 # (out_h, h_in)
    b_np = np.ascontiguousarray(_band_matrix(out_w, w_in).T)         # (w_in, out_w)

    cap = _vmem_capacity_bytes()
    vmem_budget = int(0.8 * cap)                                     # generation-aware
    bb, rt = _choose_tiles(bsz, h_in, w_in, out_h, out_w, vmem_budget)
    n_bt, n_rt = bsz // bb, out_h // rt

    in_specs = [
        _block_spec((rt, h_in), lambda bi, ri: (ri, 0),
                    single_buffer=(n_rt == 1)),                      # A row tile
        _block_spec((w_in, out_w), lambda bi, ri: (0, 0),
                    single_buffer=True),                             # Bm (resident)
        pl.BlockSpec((bb, 1, h_in, w_in), lambda bi, ri: (bi, 0, 0, 0)),  # patch scores
    ]
    out_spec = pl.BlockSpec((bb, 1, rt, out_w), lambda bi, ri: (bi, 0, ri, 0))

    call = pl.pallas_call(
        _anomaly_kernel,
        out_shape=jax.ShapeDtypeStruct((bsz, 1, out_h, out_w), jnp.float32),
        grid_spec=pltpu.PrefetchScalarGridSpec(
            num_scalar_prefetch=0,
            grid=(n_bt, n_rt),
            in_specs=in_specs,
            out_specs=out_spec,
        ),
        compiler_params=pltpu.CompilerParams(
            dimension_semantics=("parallel", "parallel"),
            vmem_limit_bytes=vmem_budget,
        ),
    )

    a_dev = jnp.asarray(a_np)
    b_dev = jnp.asarray(b_np)

    @jax.jit
    def run(patch_scores):
        return call(a_dev, b_dev, patch_scores.astype(jnp.float32))

    return run


def anomaly_map_generator(patch_scores: jnp.ndarray,
                          image_size: tuple | None = None) -> jnp.ndarray:
    """JAX/Pallas equivalent of AnomalyMapGenerator(sigma=4).forward.

    patch_scores: (B, 1, h, w) float32
    returns:      (B, 1, H, W) float32 where (H, W) = image_size or (h, w)
    """
    assert patch_scores.ndim == 4 and patch_scores.shape[1] == 1
    bsz, _, h_in, w_in = patch_scores.shape
    if image_size is None:
        out_h, out_w = int(h_in), int(w_in)
    else:
        out_h, out_w = int(image_size[0]), int(image_size[1])

    # Same restriction as F.pad(mode='reflect'): pad (16) must be < dim.
    assert out_h > PAD and out_w > PAD, "reflect padding of 16 requires output H, W > 16"

    run = _build_generator(int(bsz), int(h_in), int(w_in), out_h, out_w)
    return run(patch_scores)


def _reference_numpy(patch_scores: np.ndarray, image_size: tuple | None) -> np.ndarray:
    """Float64 NumPy reference: nearest upsample -> reflect pad -> separable blur."""
    x = np.asarray(patch_scores, np.float64)[:, 0]
    bsz, h_in, w_in = x.shape
    out_h, out_w = (image_size if image_size is not None else (h_in, w_in))
    rows = (np.arange(out_h) * h_in) // out_h
    cols = (np.arange(out_w) * w_in) // out_w
    up = x[:, rows][:, :, cols]
    padded = np.pad(up, ((0, 0), (PAD, PAD), (PAD, PAD)), mode="reflect")
    g = np.asarray(_G1D, np.float64)
    tmp = np.zeros((bsz, padded.shape[1], out_w))
    for j in range(KSIZE):
        tmp += g[j] * padded[:, :, j:j + out_w]
    out = np.zeros((bsz, out_h, out_w))
    for i in range(KSIZE):
        out += g[i] * tmp[:, i:i + out_h, :]
    return out


if __name__ == "__main__":
    # Small shapes consistent with the module: patch scores (B, 1, 16, 16)
    # upsampled to image_size=(32, 32) (reflect pad of 16 is then valid).
    patch_scores = jax.random.normal(jax.random.PRNGKey(0), (2, 1, 16, 16),
                                     dtype=jnp.float32)
    out = jax.block_until_ready(anomaly_map_generator(patch_scores, image_size=(32, 32)))
    assert out.shape == (2, 1, 32, 32), out.shape
    ref = _reference_numpy(np.asarray(patch_scores), (32, 32))
    got = np.asarray(out[:, 0])
    assert np.allclose(got, ref, atol=1e-4, rtol=1e-4), float(np.max(np.abs(got - ref)))

    # Typical PatchCore configuration: 28x28 patch grid -> 224x224 image
    # (exercises exact non-128-multiple output width and row tiling).
    ps2 = jax.random.normal(jax.random.PRNGKey(1), (2, 1, 28, 28), dtype=jnp.float32)
    out2 = jax.block_until_ready(anomaly_map_generator(ps2, image_size=(224, 224)))
    assert out2.shape == (2, 1, 224, 224), out2.shape
    ref2 = _reference_numpy(np.asarray(ps2), (224, 224))
    got2 = np.asarray(out2[:, 0])
    assert np.allclose(got2, ref2, atol=1e-4, rtol=1e-4), float(np.max(np.abs(got2 - ref2)))

    print("KERNEL_OK")
</pallas_src>

<mosaic_0001>
module attributes {stable_mosaic.version = 11 : i64} {
  func.func @_anomaly_kernel(%arg0: i32, %arg1: i32, %arg2: memref<16x16xf32, #tpu.memory_space<vmem>>, %arg3: memref<16x32xf32, #tpu.memory_space<vmem>>, %arg4: memref<2x1x16x16xf32, #tpu.memory_space<vmem>>, %arg5: memref<2x1x16x32xf32, #tpu.memory_space<vmem>>) attributes {dimension_semantics = [#tpu.dimension_semantics<parallel>, #tpu.dimension_semantics<parallel>], iteration_bounds = array<i64: 1, 2>, scalar_prefetch = 0 : i64, scratch_operands = 0 : i64, tpu.core_type = #tpu.core_type<tc>, window_params = [{transform_indices = @transform_0, window_bounds = array<i64: 16, 16>}, {pipeline_mode = #tpu.pipeline_mode<synchronous>, transform_indices = @transform_1, window_bounds = array<i64: 16, 32>}, {transform_indices = @transform_2, window_bounds = array<i64: 2, 1, 16, 16>}, {transform_indices = @transform_3, window_bounds = array<i64: 2, 1, 16, 32>}]} {
    %c0 = arith.constant 0 : index
    %c0_0 = arith.constant 0 : index
    %0 = vector.load %arg2[%c0, %c0_0] : memref<16x16xf32, #tpu.memory_space<vmem>>, vector<16x16xf32>
    %c0_1 = arith.constant 0 : index
    %c0_2 = arith.constant 0 : index
    %1 = vector.load %arg3[%c0_1, %c0_2] : memref<16x32xf32, #tpu.memory_space<vmem>>, vector<16x32xf32>
    %c0_3 = arith.constant 0 : index
    %c0_4 = arith.constant 0 : index
    %c0_5 = arith.constant 0 : index
    %c0_6 = arith.constant 0 : index
    %2 = vector.load %arg4[%c0_3, %c0_4, %c0_5, %c0_6] : memref<2x1x16x16xf32, #tpu.memory_space<vmem>>, vector<1x1x16x16xf32>
    %3 = vector.shape_cast %2 : vector<1x1x16x16xf32> to vector<16x16xf32>
    %cst = arith.constant dense<0.000000e+00> : vector<16x16xf32>
    %4 = tpu.matmul %0, %3, %cst {dimension_numbers = #tpu.dot_dimension_numbers<[1], [0], [0], [1], [0, 0, 1, 1], [], []>, precision = #tpu.contract_precision<fp32>} : vector<16x16xf32>, vector<16x16xf32>, vector<16x16xf32> -> vector<16x16xf32>
    %cst_7 = arith.constant dense<0.000000e+00> : vector<16x32xf32>
    %5 = tpu.matmul %4, %1, %cst_7 {dimension_numbers = #tpu.dot_dimension_numbers<[1], [0], [0], [1], [0, 0, 1, 1], [], []>, precision = #tpu.contract_precision<fp32>} : vector<16x16xf32>, vector<16x32xf32>, vector<16x32xf32> -> vector<16x32xf32>
    %c0_8 = arith.constant 0 : index
    %c0_9 = arith.constant 0 : index
    %c0_10 = arith.constant 0 : index
    %c0_11 = arith.constant 0 : index
    %6 = vector.load %arg5[%c0_8, %c0_9, %c0_10, %c0_11] : memref<2x1x16x32xf32, #tpu.memory_space<vmem>>, vector<1x1x16x32xf32>
    %7 = vector.shape_cast %6 : vector<1x1x16x32xf32> to vector<16x32xf32>
    %8 = vector.shape_cast %5 : vector<16x32xf32> to vector<1x1x16x32xf32>
    tpu.vector_store %arg5[%c0_8, %c0_9, %c0_10, %c0_11], %8 {strides = array<i32>} : memref<2x1x16x32xf32, #tpu.memory_space<vmem>>, vector<1x1x16x32xf32>,
    %c1 = arith.constant 1 : index
    %c0_12 = arith.constant 0 : index
    %c0_13 = arith.constant 0 : index
    %c0_14 = arith.constant 0 : index
    %9 = vector.load %arg4[%c1, %c0_12, %c0_13, %c0_14] : memref<2x1x16x16xf32, #tpu.memory_space<vmem>>, vector<1x1x16x16xf32>
    %10 = vector.shape_cast %9 : vector<1x1x16x16xf32> to vector<16x16xf32>
    %cst_15 = arith.constant dense<0.000000e+00> : vector<16x16xf32>
    %11 = tpu.matmul %0, %10, %cst_15 {dimension_numbers = #tpu.dot_dimension_numbers<[1], [0], [0], [1], [0, 0, 1, 1], [], []>, precision = #tpu.contract_precision<fp32>} : vector<16x16xf32>, vector<16x16xf32>, vector<16x16xf32> -> vector<16x16xf32>
    %cst_16 = arith.constant dense<0.000000e+00> : vector<16x32xf32>
    %12 = tpu.matmul %11, %1, %cst_16 {dimension_numbers = #tpu.dot_dimension_numbers<[1], [0], [0], [1], [0, 0, 1, 1], [], []>, precision = #tpu.contract_precision<fp32>} : vector<16x16xf32>, vector<16x32xf32>, vector<16x32xf32> -> vector<16x32xf32>
    %c1_17 = arith.constant 1 : index
    %c0_18 = arith.constant 0 : index
    %c0_19 = arith.constant 0 : index
    %c0_20 = arith.constant 0 : index
    %13 = vector.load %arg5[%c1_17, %c0_18, %c0_19, %c0_20] : memref<2x1x16x32xf32, #tpu.memory_space<vmem>>, vector<1x1x16x32xf32>
    %14 = vector.shape_cast %13 : vector<1x1x16x32xf32> to vector<16x32xf32>
    %15 = vector.shape_cast %12 : vector<16x32xf32> to vector<1x1x16x32xf32>
    tpu.vector_store %arg5[%c1_17, %c0_18, %c0_19, %c0_20], %15 {strides = array<i32>} : memref<2x1x16x32xf32, #tpu.memory_space<vmem>>, vector<1x1x16x32xf32>,
    return
  }
  func.func @transform_0(%arg0: i32, %arg1: i32) -> (i32, i32) {
    %c0_i32 = arith.constant 0 : i32
    %c0_i32_0 = arith.constant 0 : i32
    return %arg1, %c0_i32 : i32, i32
  }
  func.func @transform_1(%arg0: i32, %arg1: i32) -> (i32, i32) {
    %c0_i32 = arith.constant 0 : i32
    %c0_i32_0 = arith.constant 0 : i32
    %c0_i32_1 = arith.constant 0 : i32
    return %c0_i32, %c0_i32_0 : i32, i32
  }
  func.func @transform_2(%arg0: i32, %arg1: i32) -> (i32, i32, i32, i32) {
    %c0_i32 = arith.constant 0 : i32
    %c0_i32_0 = arith.constant 0 : i32
    %c0_i32_1 = arith.constant 0 : i32
    %c0_i32_2 = arith.constant 0 : i32
    return %arg0, %c0_i32, %c0_i32_0, %c0_i32_1 : i32, i32, i32, i32
  }
  func.func @transform_3(%arg0: i32, %arg1: i32) -> (i32, i32, i32, i32) {
    %c0_i32 = arith.constant 0 : i32
    %c0_i32_0 = arith.constant 0 : i32
    %c0_i32_1 = arith.constant 0 : i32
    return %arg0, %c0_i32, %arg1, %c0_i32_0 : i32, i32, i32, i32
  }
}

</mosaic_0001>

<llo_original>
// kernel: run.1
$region0: #{run.1}
  #allocation0 [shape = 'u32[]', space=smem, size = 0x4, offset = 0x4, fixed_abs, tag = 'smem constant byte address 0x4 - core index']
  #allocation1 [shape = 'u32[72,128]{1,0:T(1,128)}', space=vmem, size = 0x9000, scoped, tag = 'internal scratch']
  #allocation9 [shape = 's32[]', space=sflag, size = 0x4, offset = 0, fixed_abs, tag = 'sflag constant byte address 0x0 - dummy sync flag']
  %s0 = inlined_call_operand.hbm [shape: f32[32,16], index: 0, kind: input, shape index: {}]
  %s1 = inlined_call_operand.hbm [shape: f32[16,32], index: 1, kind: input, shape index: {}]
  %s2 = inlined_call_operand.hbm [shape: f32[2,1,16,16], index: 2, kind: input, shape index: {}]
  %s3 = inlined_call_operand.hbm [shape: f32[2,1,32,32], index: 3, kind: output, shape index: {}]
  %s4 = sld [smem:[#allocation0]]
  $region57: #{run.1} parent=0
    _
  %s6 = ssub.s32 1, %s4
  %s7 = scalar_select 0, %s6, %s4
  $region1: #{run.1} parent=0
    #allocation2 [shape = 'u8[16384]{0}', space=vmem, size = 0x4000, scoped, tag = 'input window, operand 0']
    #allocation3 [shape = 's32[2]{0}', space=sflag, size = 0x8, scoped, tag = 'scoped memory for run.1']
    #allocation4 [shape = 's32[2]{0}', space=sflag, size = 0x8, scoped, tag = 'scoped memory for run.1']
    #allocation5 [shape = 'u8[8192]{0}', space=vmem, size = 0x2000, scoped, tag = 'input window, operand 1, single buffered']
    #allocation6 [shape = 's32[1]{0}', space=sflag, size = 0x4, scoped, tag = 'scoped memory for run.1']
    #allocation7 [shape = 'u8[16384]{0}', space=vmem, size = 0x4000, scoped, tag = 'input window, operand 2, single buffered']
    #allocation8 [shape = 'u8[32768]{0}', space=vmem, size = 0x8000, scoped, tag = 'output window, operand 0']
    %8 = vsyncpa [#allocation3], 0
    %s9 = scalar_lea.sflag [#allocation3], 1
    %10 = vsyncpa %s9, 0
    %11 = vsyncpa [#allocation6], 0
    %12 = vsyncpa [#allocation4], 0
    %s13 = scalar_lea.sflag [#allocation4], 1
    %14 = vsyncpa %s13, 0
    loop: start=0, step=1, limit=4
    $region2: #{run.1} parent=1 // loop_pre_header
      _
    $region3: #{run.1} parent=1 // loop_header
      %s16 = sphi 0, %s20
      %p17 = scmp.ge.s32.totalorder %s16, 4
      %s23 = sphi 0, %s35
      %s24 = sphi 0, %s31
      %s25 = sphi 0, %s23
      %s26 = sphi 0, %s24
      %s27 = sphi 0, %s25
      %s28 = sphi 0, %s26
      %s38 = sphi 0, %s40
      %s41 = sphi 0, %s38
      %s42 = sphi 0, %s41
      %s58 = sphi 0, %s42
      %s62 = sphi 0, %s62
      %s64 = sphi 0, %s62
      %s65 = sphi 0, %s64
      %s79 = sphi 0, %s65
      %s85 = sphi 0, %s87
      %s88 = sphi 0, %s85
      %s89 = sphi 0, %s88
      %s105 = sphi 0, %s89
      %s113 = sphi 0, %s115
      %s116 = sphi 0, %s113
      %s117 = sphi 0, %s116
      %s133 = sphi 0, %s117
    $region4: #{run.1} parent=1 // loop_header_branch
      %19 = sbr.rel (%p17) target = $region8
    $region5: #{run.1} parent=1 // loop_body
      %s21 = ssub.s32 %s16, 1
      %s22 = ssub.s32 %s16, 2
      %s29 = sadd.s32 1, %s24
      %p30 = scmp.ge.s32.totalorder %s29, 2
      %s31 = scalar_select %p30, 0, %s29
      %s32 = sadd.s32 1, %s23
      %s33 = scalar_select %p30, %s32, %s23
      %p34 = scmp.ge.s32.totalorder %s33, 1
      %s35 = scalar_select %p34, 0, %s33
      %s36 = ssub.s32 %s24, %s31
      %p37 = scmp.eq.s32.totalorder %s36, 0
      %s39 = sadd.s32 %s38, 1
      %s40 = scalar_select %p37, %s38, %s39
      %p43 = pneg %p37
      %p44 = scmp.eq.s32.totalorder %s16, 1
      %p45 = por %p43, %p44
      %p46 = scmp.ne.s32.totalorder %s38, %s41
      %p47 = scmp.eq.s32.totalorder %s16, 0
      %p48 = por %p46, %p47
      %p49 = scmp.ne.s32.totalorder %s38, %s41
      %p50 = scmp.eq.s32.totalorder %s21, 1
      %p51 = por %p49, %p50
      %p52 = scmp.ne.s32.totalorder %s41, %s42
      %p53 = scmp.eq.s32.totalorder %s21, 0
      %p54 = por %p52, %p53
      %p55 = scmp.ne.s32.totalorder %s41, %s42
      %p56 = scmp.eq.s32.totalorder %s22, 1
      %p57 = por %p55, %p56
      %p59 = scmp.ne.s32.totalorder %s42, %s58
      %p60 = scmp.eq.s32.totalorder %s22, 0
      %p61 = por %p59, %p60
      %s63 = sadd.s32 %s62, 1
      %p66 = scmp.eq.s32.totalorder %s16, 1
      %p67 = scmp.ne.s32.totalorder %s62, %s64
      %p68 = scmp.eq.s32.totalorder %s16, 0
      %p69 = por %p67, %p68
      %p70 = scmp.ne.s32.totalorder %s62, %s64
      %p71 = scmp.eq.s32.totalorder %s21, 1
      %p72 = por %p70, %p71
      %p73 = scmp.ne.s32.totalorder %s64, %s65
      %p74 = scmp.eq.s32.totalorder %s21, 0
      %p75 = por %p73, %p74
      %p76 = scmp.ne.s32.totalorder %s64, %s65
      %p77 = scmp.eq.s32.totalorder %s22, 1
      %p78 = por %p76, %p77
      %p80 = scmp.ne.s32.totalorder %s65, %s79
      %p81 = scmp.eq.s32.totalorder %s22, 0
      %p82 = por %p80, %p81
      %s83 = ssub.s32 %s23, %s35
      %p84 = scmp.eq.s32.totalorder %s83, 0
      %s86 = sadd.s32 %s85, 1
      %s87 = scalar_select %p84, %s85, %s86
      %p90 = pneg %p84
      %p91 = scmp.eq.s32.totalorder %s16, 1
      %p92 = por %p90, %p91
      %p93 = scmp.ne.s32.totalorder %s85, %s88
      %p94 = scmp.eq.s32.totalorder %s16, 0
      %p95 = por %p93, %p94
      %p96 = scmp.ne.s32.totalorder %s85, %s88
      %p97 = scmp.eq.s32.totalorder %s21, 1
      %p98 = por %p96, %p97
      %p99 = scmp.ne.s32.totalorder %s88, %s89
      %p100 = scmp.eq.s32.totalorder %s21, 0
      %p101 = por %p99, %p100
      %p102 = scmp.ne.s32.totalorder %s88, %s89
      %p103 = scmp.eq.s32.totalorder %s22, 1
      %p104 = por %p102, %p103
      %p106 = scmp.ne.s32.totalorder %s89, %s105
      %p107 = scmp.eq.s32.totalorder %s22, 0
      %p108 = por %p106, %p107
      %s109 = ssub.s32 %s23, %s35
      %s110 = ssub.s32 %s24, %s31
      %s111 = sor.u32 %s109, %s110
      %p112 = scmp.eq.s32.totalorder %s111, 0
      %s114 = sadd.s32 %s113, 1
      %s115 = scalar_select %p112, %s113, %s114
      %p118 = pneg %p112
      %p119 = scmp.eq.s32.totalorder %s16, 1
      %p120 = por %p118, %p119
      %p121 = scmp.ne.s32.totalorder %s113, %s116
      %p122 = scmp.eq.s32.totalorder %s16, 0
      %p123 = por %p121, %p122
      %p124 = scmp.ne.s32.totalorder %s113, %s116
      %p125 = scmp.eq.s32.totalorder %s21, 1
      %p126 = por %p124, %p125
      %p127 = scmp.ne.s32.totalorder %s116, %s117
      %p128 = scmp.eq.s32.totalorder %s21, 0
      %p129 = por %p127, %p128
      %p130 = scmp.ne.s32.totalorder %s116, %s117
      %p131 = scmp.eq.s32.totalorder %s22, 1
      %p132 = por %p130, %p131
      %p134 = scmp.ne.s32.totalorder %s117, %s133
      %p135 = scmp.eq.s32.totalorder %s22, 0
      %p136 = por %p134, %p135
      %p137 = scmp.le.s32.totalorder 1, %s16
      %p138 = scmp.lt.s32.totalorder %s16, 3
      %p139 = pnand %p137, %p138
      %p140 = pneg %p139
      // Predicated region
      $region9: #{run.1} parent=5 // pred_check
        _
      $region10: #{run.1} parent=5 // pred_check_branch
        %142 = sbr.rel (%p139) target = $region12
      $region11: #{run.1} parent=5 // pred_region
        %s143 = ssub.s32 %s16, 1
        // Predicated region
        $region13: #{run.1} parent=11 // pred_check
          %p144 = pneg %p75
        $region14: #{run.1} parent=11 // pred_check_branch
          %146 = sbr.rel (%p144) target = $region16
        $region15: #{run.1} parent=11 // pred_region
          %148 = vsyncadd [#allocation6], 0
          %s149 = sshll.u32 %s1, 4
          %s150 = int_to_ptr.hbm [resolvable:$true] %s149
          %s151 = sshll.u32 [#allocation5], 4
          %s152 = int_to_ptr.vmem [resolvable:$true] %s151
          %157 = dma.hbm_to_vmem [thread:$0]  %s150, 256, %s152, [#allocation6], 128, 128, 8
        $region16: #{run.1} parent=11 // pred_fallthru
          _
        // Predicated region
        $region17: #{run.1} parent=11 // pred_check
          %p158 = pneg %p101
        $region18: #{run.1} parent=11 // pred_check_branch
          %160 = sbr.rel (%p158) target = $region20
        $region19: #{run.1} parent=11 // pred_region
          %s161 = smul.u32 2, %s25
          %163 = vsyncadd [#allocation6], 0
          %s164 = smul.addr %s161, 2
          %s165 = smul.addr %s164, 8
          %s166 = scalar_lea.hbm %s2, %s165
          %s167 = sshll.u32 %s166, 4
          %s168 = int_to_ptr.hbm [resolvable:$true] %s167
          %s169 = sshll.u32 [#allocation7], 4
          %s170 = int_to_ptr.vmem [resolvable:$true] %s169
          %175 = dma.hbm_to_vmem [thread:$0]  %s168, 512, %s170, [#allocation6], 128, 128, 8
        $region20: #{run.1} parent=11 // pred_fallthru
          _
      $region12: #{run.1} parent=5 // pred_fallthru
        _
      %p176 = scmp.lt.s32.totalorder %s16, 2
      // Predicated region
      $region21: #{run.1} parent=5 // pred_check
        %p177 = pneg %p176
      $region22: #{run.1} parent=5 // pred_check_branch
        %179 = sbr.rel (%p177) target = $region24
      $region23: #{run.1} parent=5 // pred_region
        // Predicated region
        $region25: #{run.1} parent=23 // pred_check
          %p180 = pneg %p48
        $region26: #{run.1} parent=23 // pred_check_branch
          %182 = sbr.rel (%p180) target = $region28
        $region27: #{run.1} parent=23 // pred_region
          %s183 = sand.u32 %s38, 1
          %s184 = scalar_lea.sflag [#allocation3], %s183
          %s185 = sand.u32 %s38, 1
          %s186 = smul.addr %s185, 16
          %s187 = scalar_lea.vmem [#allocation2], %s186
          %s188 = smul.u32 2, %s24
          %190 = vsyncadd %s184, 0
          %s191 = smul.addr %s188, 8
          %s192 = scalar_lea.hbm %s0, %s191
          %s193 = sshll.u32 %s192, 4
          %s194 = int_to_ptr.hbm [resolvable:$true] %s193
          %s195 = sshll.u32 %s187, 4
          %s196 = int_to_ptr.vmem [resolvable:$true] %s195
          %201 = dma.hbm_to_vmem [thread:$0]  %s194, 256, %s196, %s184, 128, 128, 8
        $region28: #{run.1} parent=23 // pred_fallthru
          _
      $region24: #{run.1} parent=5 // pred_fallthru
        _
      %p202 = scmp.le.s32.totalorder 1, %s16
      %p203 = scmp.lt.s32.totalorder %s16, 3
      %p204 = pnand %p202, %p203
      %p205 = pneg %p204
      // Predicated region
      $region29: #{run.1} parent=5 // pred_check
        _
      $region30: #{run.1} parent=5 // pred_check_branch
        %207 = sbr.rel (%p204) target = $region32
      $region31: #{run.1} parent=5 // pred_region
        %s208 = ssub.s32 %s16, 1
        %s209 = sand.u32 %s41, 1
        %s210 = scalar_lea.sflag [#allocation3], %s209
        %s211 = sand.u32 %s41, 1
        %s212 = smul.addr %s211, 16
        %s213 = scalar_lea.vmem [#allocation2], %s212
        // Predicated region
        $region33: #{run.1} parent=31 // pred_check
          %p214 = pneg %p54
        $region34: #{run.1} parent=31 // pred_check_branch
          %216 = sbr.rel (%p214) target = $region36
        $region35: #{run.1} parent=31 // pred_region
          %218 = dma.done %s210, 256
        $region36: #{run.1} parent=31 // pred_fallthru
          _
        // Predicated region
        $region37: #{run.1} parent=31 // pred_check
          %p219 = pneg %p75
        $region38: #{run.1} parent=31 // pred_check_branch
          %221 = sbr.rel (%p219) target = $region40
        $region39: #{run.1} parent=31 // pred_region
          %223 = dma.done [#allocation6], 256
        $region40: #{run.1} parent=31 // pred_fallthru
          _
        // Predicated region
        $region41: #{run.1} parent=31 // pred_check
          %p224 = pneg %p101
        $region42: #{run.1} parent=31 // pred_check_branch
          %226 = sbr.rel (%p224) target = $region44
        $region43: #{run.1} parent=31 // pred_region
          %228 = dma.done [#allocation6], 512
        $region44: #{run.1} parent=31 // pred_fallthru
          _
        %s229 = sand.u32 %s41, 1
        %s230 = scalar_lea.sflag [#allocation3], %s229
        %s231 = sand.u32 %s41, 1
        %s232 = smul.addr %s231, 16
        %s233 = scalar_lea.vmem [#allocation2], %s232
        %p234 = pneg %p54
        %p235 = pneg %p51
        %p236 = pneg %p75
        %p237 = pneg %p72
        %p238 = pneg %p101
        %p239 = pneg %p98
        %p240 = pneg %p129
        %p241 = pneg %p126
        %s242 = sand.u32 %s116, 1
        %s243 = scalar_lea.sflag [#allocation4], %s242
        %s244 = sand.u32 %s116, 1
        %s245 = smul.addr %s244, 32
        %s246 = scalar_lea.vmem [#allocation8], %s245
        %s247 = smul.u32 2, %s26
        %s248 = smul.u32 2, %s25
        %s249 = smul.u32 2, %s25
        %s250 = smul.u32 2, %s26
        %v251 = vld [vmem:[%s213] sm:$0xff]
        %v252 = vld [vmem:[%s213 + $0x8] sm:$0xff]
        %v253 = vld [vmem:[#allocation5] sm:$0xff]
        %v254 = vld [vmem:[#allocation5 + $0x8] sm:$0xff]
        %v255 = vld [vmem:[#allocation7] sm:$0xff]
        %v256 = vld [vmem:[#allocation7 + $0x8] sm:$0xff]
        %vm257 = vcmask 130048
        %v259 = vsel %vm257, %v251, 0
        %v262 = vsel %vm257, %v252, 0
        %264 = vmatpush.msra.mxu0 0.0
        %265 = vmatpush.msra.mxu0 0.0
        %266 = vmatpush.msra.mxu0 0.0
        %267 = vmatpush.msra.mxu0 0.0
        %268 = vmatpush.msra.mxu0 0.0
        %269 = vmatpush.msra.mxu0 0.0
        %270 = vmatpush.msra.mxu0 0.0
        %271 = vmatpush.msra.mxu0 0.0
        %272 = vmatpush.msra.mxu0 0.0
        %273 = vmatpush.msra.mxu0 0.0
        %274 = vmatpush.msra.mxu0 0.0
        %275 = vmatpush.msra.mxu0 0.0
        %276 = vmatpush.msra.mxu0 0.0
        %277 = vmatpush.msra.mxu0 0.0
        %v278 = vand.u32 %v256, 4294901760
        %279 = vmatpush.msra.mxu0 %v278
        %v280 = vand.u32 %v255, 4294901760
        %281 = vmatpush.msra.mxu0 %v280
        %v282 = vand.u32 %v259, 4294901760
        %v283 = vsub.f32 %v259, %v282
        %v284 = vand.u32 %v283, 4294901760
        %v285 = vsub.f32 %v283, %v284
        %v286 = vand.u32 %v285, 4294901760
        %287 = vmatmul.f32.gmra.mxu0 %v286
        %v288 = vpop.f32.mrf.mxu0
        %v289 = vadd.f32 0.0, %v288
        %v290 = vand.u32 %v262, 4294901760
        %v291 = vsub.f32 %v262, %v290
        %v292 = vand.u32 %v291, 4294901760
        %v293 = vsub.f32 %v291, %v292
        %v294 = vand.u32 %v293, 4294901760
        %295 = vmatmul.f32.gmra.mxu0 %v294
        %v296 = vpop.f32.mrf.mxu0
        %v297 = vadd.f32 0.0, %v296
        %298 = vdwg.mxu0
        %299 = vmatpush.msra.mxu0 0.0
        %300 = vmatpush.msra.mxu0 0.0
        %301 = vmatpush.msra.mxu0 0.0
        %302 = vmatpush.msra.mxu0 0.0
        %303 = vmatpush.msra.mxu0 0.0
        %304 = vmatpush.msra.mxu0 0.0
        %305 = vmatpush.msra.mxu0 0.0
        %306 = vmatpush.msra.mxu0 0.0
        %307 = vmatpush.msra.mxu0 0.0
        %308 = vmatpush.msra.mxu0 0.0
        %309 = vmatpush.msra.mxu0 0.0
        %310 = vmatpush.msra.mxu0 0.0
        %311 = vmatpush.msra.mxu0 0.0
        %312 = vmatpush.msra.mxu0 0.0
        %v313 = vand.u32 %v256, 4294901760
        %v314 = vsub.f32 %v256, %v313
        %v315 = vand.u32 %v314, 4294901760
        %v316 = vsub.f32 %v314, %v315
        %v317 = vand.u32 %v316, 4294901760
        %318 = vmatpush.msra.mxu0 %v317
        %v319 = vand.u32 %v255, 4294901760
        %v320 = vsub.f32 %v255, %v319
        %v321 = vand.u32 %v320, 4294901760
        %v322 = vsub.f32 %v320, %v321
        %v323 = vand.u32 %v322, 4294901760
        %324 = vmatpush.msra.mxu0 %v323
        %v325 = vand.u32 %v259, 4294901760
        %326 = vmatmul.f32.gmra.mxu0 %v325
        %v327 = vpop.f32.mrf.mxu0
        %v328 = vadd.f32 %v289, %v327
        %v329 = vand.u32 %v262, 4294901760
        %330 = vmatmul.f32.gmra.mxu0 %v329
        %v331 = vpop.f32.mrf.mxu0
        %v332 = vadd.f32 %v297, %v331
        %333 = vdwg.mxu0
        %334 = vmatpush.msra.mxu0 0.0
        %335 = vmatpush.msra.mxu0 0.0
        %336 = vmatpush.msra.mxu0 0.0
        %337 = vmatpush.msra.mxu0 0.0
        %338 = vmatpush.msra.mxu0 0.0
        %339 = vmatpush.msra.mxu0 0.0
        %340 = vmatpush.msra.mxu0 0.0
        %341 = vmatpush.msra.mxu0 0.0
        %342 = vmatpush.msra.mxu0 0.0
        %343 = vmatpush.msra.mxu0 0.0
        %344 = vmatpush.msra.mxu0 0.0
        %345 = vmatpush.msra.mxu0 0.0
        %346 = vmatpush.msra.mxu0 0.0
        %347 = vmatpush.msra.mxu0 0.0
        %v348 = vand.u32 %v256, 4294901760
        %v349 = vsub.f32 %v256, %v348
        %350 = vmatpush.msra.mxu0 %v349
        %v351 = vand.u32 %v255, 4294901760
        %v352 = vsub.f32 %v255, %v351
        %353 = vmatpush.msra.mxu0 %v352
        %v354 = vand.u32 %v259, 4294901760
        %v355 = vsub.f32 %v259, %v354
        %356 = vmatmul.f32.gmra.mxu0 %v355
        %v357 = vpop.f32.mrf.mxu0
        %v358 = vadd.f32 %v328, %v357
        %v359 = vand.u32 %v262, 4294901760
        %v360 = vsub.f32 %v262, %v359
        %361 = vmatmul.f32.gmra.mxu0 %v360
        %v362 = vpop.f32.mrf.mxu0
        %v363 = vadd.f32 %v332, %v362
        %364 = vdwg.mxu0
        %365 = vmatpush.msra.mxu0 0.0
        %366 = vmatpush.msra.mxu0 0.0
        %367 = vmatpush.msra.mxu0 0.0
        %368 = vmatpush.msra.mxu0 0.0
        %369 = vmatpush.msra.mxu0 0.0
        %370 = vmatpush.msra.mxu0 0.0
        %371 = vmatpush.msra.mxu0 0.0
        %372 = vmatpush.msra.mxu0 0.0
        %373 = vmatpush.msra.mxu0 0.0
        %374 = vmatpush.msra.mxu0 0.0
        %375 = vmatpush.msra.mxu0 0.0
        %376 = vmatpush.msra.mxu0 0.0
        %377 = vmatpush.msra.mxu0 0.0
        %378 = vmatpush.msra.mxu0 0.0
        %v379 = vand.u32 %v256, 4294901760
        %380 = vmatpush.msra.mxu0 %v379
        %v381 = vand.u32 %v255, 4294901760
        %382 = vmatpush.msra.mxu0 %v381
        %v383 = vand.u32 %v259, 4294901760
        %v384 = vsub.f32 %v259, %v383
        %v385 = vand.u32 %v384, 4294901760
        %386 = vmatmul.f32.gmra.mxu0 %v385
        %v387 = vpop.f32.mrf.mxu0
        %v388 = vadd.f32 %v358, %v387
        %v389 = vand.u32 %v262, 4294901760
        %v390 = vsub.f32 %v262, %v389
        %v391 = vand.u32 %v390, 4294901760
        %392 = vmatmul.f32.gmra.mxu0 %v391
        %v393 = vpop.f32.mrf.mxu0
        %v394 = vadd.f32 %v363, %v393
        %395 = vdwg.mxu0
        %396 = vmatpush.msra.mxu0 0.0
        %397 = vmatpush.msra.mxu0 0.0
        %398 = vmatpush.msra.mxu0 0.0
        %399 = vmatpush.msra.mxu0 0.0
        %400 = vmatpush.msra.mxu0 0.0
        %401 = vmatpush.msra.mxu0 0.0
        %402 = vmatpush.msra.mxu0 0.0
        %403 = vmatpush.msra.mxu0 0.0
        %404 = vmatpush.msra.mxu0 0.0
        %405 = vmatpush.msra.mxu0 0.0
        %406 = vmatpush.msra.mxu0 0.0
        %407 = vmatpush.msra.mxu0 0.0
        %408 = vmatpush.msra.mxu0 0.0
        %409 = vmatpush.msra.mxu0 0.0
        %v410 = vand.u32 %v256, 4294901760
        %v411 = vsub.f32 %v256, %v410
        %v412 = vand.u32 %v411, 4294901760
        %413 = vmatpush.msra.mxu0 %v412
        %v414 = vand.u32 %v255, 4294901760
        %v415 = vsub.f32 %v255, %v414
        %v416 = vand.u32 %v415, 4294901760
        %417 = vmatpush.msra.mxu0 %v416
        %v418 = vand.u32 %v259, 4294901760
        %419 = vmatmul.f32.gmra.mxu0 %v418
        %v420 = vpop.f32.mrf.mxu0
        %v421 = vadd.f32 %v388, %v420
        %v422 = vand.u32 %v262, 4294901760
        %423 = vmatmul.f32.gmra.mxu0 %v422
        %v424 = vpop.f32.mrf.mxu0
        %v425 = vadd.f32 %v394, %v424
        %426 = vdwg.mxu0
        %427 = vmatpush.msra.mxu0 0.0
        %428 = vmatpush.msra.mxu0 0.0
        %429 = vmatpush.msra.mxu0 0.0
        %430 = vmatpush.msra.mxu0 0.0
        %431 = vmatpush.msra.mxu0 0.0
        %432 = vmatpush.msra.mxu0 0.0
        %433 = vmatpush.msra.mxu0 0.0
        %434 = vmatpush.msra.mxu0 0.0
        %435 = vmatpush.msra.mxu0 0.0
        %436 = vmatpush.msra.mxu0 0.0
        %437 = vmatpush.msra.mxu0 0.0
        %438 = vmatpush.msra.mxu0 0.0
        %439 = vmatpush.msra.mxu0 0.0
        %440 = vmatpush.msra.mxu0 0.0
        %v441 = vand.u32 %v256, 4294901760
        %442 = vmatpush.msra.mxu0 %v441
        %v443 = vand.u32 %v255, 4294901760
        %444 = vmatpush.msra.mxu0 %v443
        %v445 = vand.u32 %v259, 4294901760
        %446 = vmatmul.f32.gmra.mxu0 %v445
        %v447 = vpop.f32.mrf.mxu0
        %v448 = vadd.f32 %v421, %v447
        %v449 = vand.u32 %v262, 4294901760
        %450 = vmatmul.f32.gmra.mxu0 %v449
        %v451 = vpop.f32.mrf.mxu0
        %v452 = vadd.f32 %v425, %v451
        %453 = vdwg.mxu0
        %v455 = vsel %vm257, %v448, 0
        %v458 = vsel %vm257, %v452, 0
        %460 = vmatpush.msra.mxu0 0.0
        %461 = vmatpush.msra.mxu0 0.0
        %462 = vmatpush.msra.mxu0 0.0
        %463 = vmatpush.msra.mxu0 0.0
        %464 = vmatpush.msra.mxu0 0.0
        %465 = vmatpush.msra.mxu0 0.0
        %466 = vmatpush.msra.mxu0 0.0
        %467 = vmatpush.msra.mxu0 0.0
        %468 = vmatpush.msra.mxu0 0.0
        %469 = vmatpush.msra.mxu0 0.0
        %470 = vmatpush.msra.mxu0 0.0
        %471 = vmatpush.msra.mxu0 0.0
        %472 = vmatpush.msra.mxu0 0.0
        %473 = vmatpush.msra.mxu0 0.0
        %v474 = vand.u32 %v254, 4294901760
        %475 = vmatpush.msra.mxu0 %v474
        %v476 = vand.u32 %v253, 4294901760
        %477 = vmatpush.msra.mxu0 %v476
        %v478 = vand.u32 %v455, 4294901760
        %v479 = vsub.f32 %v455, %v478
        %v480 = vand.u32 %v479, 4294901760
        %v481 = vsub.f32 %v479, %v480
        %v482 = vand.u32 %v481, 4294901760
        %483 = vmatmul.f32.gmra.mxu0 %v482
        %v484 = vpop.f32.mrf.mxu0
        %v485 = vadd.f32 0.0, %v484
        %v486 = vand.u32 %v458, 4294901760
        %v487 = vsub.f32 %v458, %v486
        %v488 = vand.u32 %v487, 4294901760
        %v489 = vsub.f32 %v487, %v488
        %v490 = vand.u32 %v489, 4294901760
        %491 = vmatmul.f32.gmra.mxu0 %v490
        %v492 = vpop.f32.mrf.mxu0
        %v493 = vadd.f32 0.0, %v492
        %494 = vdwg.mxu0
        %495 = vmatpush.msra.mxu0 0.0
        %496 = vmatpush.msra.mxu0 0.0
        %497 = vmatpush.msra.mxu0 0.0
        %498 = vmatpush.msra.mxu0 0.0
        %499 = vmatpush.msra.mxu0 0.0
        %500 = vmatpush.msra.mxu0 0.0
        %501 = vmatpush.msra.mxu0 0.0
        %502 = vmatpush.msra.mxu0 0.0
        %503 = vmatpush.msra.mxu0 0.0
        %504 = vmatpush.msra.mxu0 0.0
        %505 = vmatpush.msra.mxu0 0.0
        %506 = vmatpush.msra.mxu0 0.0
        %507 = vmatpush.msra.mxu0 0.0
        %508 = vmatpush.msra.mxu0 0.0
        %v509 = vand.u32 %v254, 4294901760
        %v510 = vsub.f32 %v254, %v509
        %v511 = vand.u32 %v510, 4294901760
        %v512 = vsub.f32 %v510, %v511
        %v513 = vand.u32 %v512, 4294901760
        %514 = vmatpush.msra.mxu0 %v513
        %v515 = vand.u32 %v253, 4294901760
        %v516 = vsub.f32 %v253, %v515
        %v517 = vand.u32 %v516, 4294901760
        %v518 = vsub.f32 %v516, %v517
        %v519 = vand.u32 %v518, 4294901760
        %520 = vmatpush.msra.mxu0 %v519
        %v521 = vand.u32 %v455, 4294901760
        %522 = vmatmul.f32.gmra.mxu0 %v521
        %v523 = vpop.f32.mrf.mxu0
        %v524 = vadd.f32 %v485, %v523
        %v525 = vand.u32 %v458, 4294901760
        %526 = vmatmul.f32.gmra.mxu0 %v525
        %v527 = vpop.f32.mrf.mxu0
        %v528 = vadd.f32 %v493, %v527
        %529 = vdwg.mxu0
        %530 = vmatpush.msra.mxu0 0.0
        %531 = vmatpush.msra.mxu0 0.0
        %532 = vmatpush.msra.mxu0 0.0
        %533 = vmatpush.msra.mxu0 0.0
        %534 = vmatpush.msra.mxu0 0.0
        %535 = vmatpush.msra.mxu0 0.0
        %536 = vmatpush.msra.mxu0 0.0
        %537 = vmatpush.msra.mxu0 0.0
        %538 = vmatpush.msra.mxu0 0.0
        %539 = vmatpush.msra.mxu0 0.0
        %540 = vmatpush.msra.mxu0 0.0
        %541 = vmatpush.msra.mxu0 0.0
        %542 = vmatpush.msra.mxu0 0.0
        %543 = vmatpush.msra.mxu0 0.0
        %v544 = vand.u32 %v254, 4294901760
        %v545 = vsub.f32 %v254, %v544
        %546 = vmatpush.msra.mxu0 %v545
        %v547 = vand.u32 %v253, 4294901760
        %v548 = vsub.f32 %v253, %v547
        %549 = vmatpush.msra.mxu0 %v548
        %v550 = vand.u32 %v455, 4294901760
        %v551 = vsub.f32 %v455, %v550
        %552 = vmatmul.f32.gmra.mxu0 %v551
        %v553 = vpop.f32.mrf.mxu0
        %v554 = vadd.f32 %v524, %v553
        %v555 = vand.u32 %v458, 4294901760
        %v556 = vsub.f32 %v458, %v555
        %557 = vmatmul.f32.gmra.mxu0 %v556
        %v558 = vpop.f32.mrf.mxu0
        %v559 = vadd.f32 %v528, %v558
        %560 = vdwg.mxu0
        %561 = vmatpush.msra.mxu0 0.0
        %562 = vmatpush.msra.mxu0 0.0
        %563 = vmatpush.msra.mxu0 0.0
        %564 = vmatpush.msra.mxu0 0.0
        %565 = vmatpush.msra.mxu0 0.0
        %566 = vmatpush.msra.mxu0 0.0
        %567 = vmatpush.msra.mxu0 0.0
        %568 = vmatpush.msra.mxu0 0.0
        %569 = vmatpush.msra.mxu0 0.0
        %570 = vmatpush.msra.mxu0 0.0
        %571 = vmatpush.msra.mxu0 0.0
        %572 = vmatpush.msra.mxu0 0.0
        %573 = vmatpush.msra.mxu0 0.0
        %574 = vmatpush.msra.mxu0 0.0
        %v575 = vand.u32 %v254, 4294901760
        %576 = vmatpush.msra.mxu0 %v575
        %v577 = vand.u32 %v253, 4294901760
        %578 = vmatpush.msra.mxu0 %v577
        %v579 = vand.u32 %v455, 4294901760
        %v580 = vsub.f32 %v455, %v579
        %v581 = vand.u32 %v580, 4294901760
        %582 = vmatmul.f32.gmra.mxu0 %v581
        %v583 = vpop.f32.mrf.mxu0
        %v584 = vadd.f32 %v554, %v583
        %v585 = vand.u32 %v458, 4294901760
        %v586 = vsub.f32 %v458, %v585
        %v587 = vand.u32 %v586, 4294901760
        %588 = vmatmul.f32.gmra.mxu0 %v587
        %v589 = vpop.f32.mrf.mxu0
        %v590 = vadd.f32 %v559, %v589
        %591 = vdwg.mxu0
        %592 = vmatpush.msra.mxu0 0.0
        %593 = vmatpush.msra.mxu0 0.0
        %594 = vmatpush.msra.mxu0 0.0
        %595 = vmatpush.msra.mxu0 0.0
        %596 = vmatpush.msra.mxu0 0.0
        %597 = vmatpush.msra.mxu0 0.0
        %598 = vmatpush.msra.mxu0 0.0
        %599 = vmatpush.msra.mxu0 0.0
        %600 = vmatpush.msra.mxu0 0.0
        %601 = vmatpush.msra.mxu0 0.0
        %602 = vmatpush.msra.mxu0 0.0
        %603 = vmatpush.msra.mxu0 0.0
        %604 = vmatpush.msra.mxu0 0.0
        %605 = vmatpush.msra.mxu0 0.0
        %v606 = vand.u32 %v254, 4294901760
        %v607 = vsub.f32 %v254, %v606
        %v608 = vand.u32 %v607, 4294901760
        %609 = vmatpush.msra.mxu0 %v608
        %v610 = vand.u32 %v253, 4294901760
        %v611 = vsub.f32 %v253, %v610
        %v612 = vand.u32 %v611, 4294901760
        %613 = vmatpush.msra.mxu0 %v612
        %v614 = vand.u32 %v455, 4294901760
        %615 = vmatmul.f32.gmra.mxu0 %v614
        %v616 = vpop.f32.mrf.mxu0
        %v617 = vadd.f32 %v584, %v616
        %v618 = vand.u32 %v458, 4294901760
        %619 = vmatmul.f32.gmra.mxu0 %v618
        %v620 = vpop.f32.mrf.mxu0
        %v621 = vadd.f32 %v590, %v620
        %622 = vdwg.mxu0
        %623 = vmatpush.msra.mxu0 0.0
        %624 = vmatpush.msra.mxu0 0.0
        %625 = vmatpush.msra.mxu0 0.0
        %626 = vmatpush.msra.mxu0 0.0
        %627 = vmatpush.msra.mxu0 0.0
        %628 = vmatpush.msra.mxu0 0.0
        %629 = vmatpush.msra.mxu0 0.0
        %630 = vmatpush.msra.mxu0 0.0
        %631 = vmatpush.msra.mxu0 0.0
        %632 = vmatpush.msra.mxu0 0.0
        %633 = vmatpush.msra.mxu0 0.0
        %634 = vmatpush.msra.mxu0 0.0
        %635 = vmatpush.msra.mxu0 0.0
        %636 = vmatpush.msra.mxu0 0.0
        %v637 = vand.u32 %v254, 4294901760
        %638 = vmatpush.msra.mxu0 %v637
        %v639 = vand.u32 %v253, 4294901760
        %640 = vmatpush.msra.mxu0 %v639
        %v641 = vand.u32 %v455, 4294901760
        %642 = vmatmul.f32.gmra.mxu0 %v641
        %v643 = vpop.f32.mrf.mxu0
        %v644 = vadd.f32 %v617, %v643
        %v645 = vand.u32 %v458, 4294901760
        %646 = vmatmul.f32.gmra.mxu0 %v645
        %v647 = vpop.f32.mrf.mxu0
        %v648 = vadd.f32 %v621, %v647
        %649 = vdwg.mxu0
        %vm650 = vcmask 261120
        %651 = vst.msk [vmem:[%s246] sm:$0xff] %vm650, %v644
        %652 = vst.msk [vmem:[%s246 + $0x8] sm:$0xff] %vm650, %v648
        %s653 = scalar_lea.vmem [#allocation7], 16
        %v654 = vld [vmem:[%s653] sm:$0xff]
        %v655 = vld [vmem:[%s653 + $0x8] sm:$0xff]
        %656 = vmatpush.msra.mxu0 0.0
        %657 = vmatpush.msra.mxu0 0.0
        %658 = vmatpush.msra.mxu0 0.0
        %659 = vmatpush.msra.mxu0 0.0
        %660 = vmatpush.msra.mxu0 0.0
        %661 = vmatpush.msra.mxu0 0.0
        %662 = vmatpush.msra.mxu0 0.0
        %663 = vmatpush.msra.mxu0 0.0
        %664 = vmatpush.msra.mxu0 0.0
        %665 = vmatpush.msra.mxu0 0.0
        %666 = vmatpush.msra.mxu0 0.0
        %667 = vmatpush.msra.mxu0 0.0
        %668 = vmatpush.msra.mxu0 0.0
        %669 = vmatpush.msra.mxu0 0.0
        %v670 = vand.u32 %v655, 4294901760
        %671 = vmatpush.msra.mxu0 %v670
        %v672 = vand.u32 %v654, 4294901760
        %673 = vmatpush.msra.mxu0 %v672
        %v674 = vand.u32 %v259, 4294901760
        %v675 = vsub.f32 %v259, %v674
        %v676 = vand.u32 %v675, 4294901760
        %v677 = vsub.f32 %v675, %v676
        %v678 = vand.u32 %v677, 4294901760
        %679 = vmatmul.f32.gmra.mxu0 %v678
        %v680 = vpop.f32.mrf.mxu0
        %v681 = vadd.f32 0.0, %v680
        %v682 = vand.u32 %v262, 4294901760
        %v683 = vsub.f32 %v262, %v682
        %v684 = vand.u32 %v683, 4294901760
        %v685 = vsub.f32 %v683, %v684
        %v686 = vand.u32 %v685, 4294901760
        %687 = vmatmul.f32.gmra.mxu0 %v686
        %v688 = vpop.f32.mrf.mxu0
        %v689 = vadd.f32 0.0, %v688
        %690 = vdwg.mxu0
        %691 = vmatpush.msra.mxu0 0.0
        %692 = vmatpush.msra.mxu0 0.0
        %693 = vmatpush.msra.mxu0 0.0
        %694 = vmatpush.msra.mxu0 0.0
        %695 = vmatpush.msra.mxu0 0.0
        %696 = vmatpush.msra.mxu0 0.0
        %697 = vmatpush.msra.mxu0 0.0
        %698 = vmatpush.msra.mxu0 0.0
        %699 = vmatpush.msra.mxu0 0.0
        %700 = vmatpush.msra.mxu0 0.0
        %701 = vmatpush.msra.mxu0 0.0
        %702 = vmatpush.msra.mxu0 0.0
        %703 = vmatpush.msra.mxu0 0.0
        %704 = vmatpush.msra.mxu0 0.0
        %v705 = vand.u32 %v655, 4294901760
        %v706 = vsub.f32 %v655, %v705
        %v707 = vand.u32 %v706, 4294901760
        %v708 = vsub.f32 %v706, %v707
        %v709 = vand.u32 %v708, 4294901760
        %710 = vmatpush.msra.mxu0 %v709
        %v711 = vand.u32 %v654, 4294901760
        %v712 = vsub.f32 %v654, %v711
        %v713 = vand.u32 %v712, 4294901760
        %v714 = vsub.f32 %v712, %v713
        %v715 = vand.u32 %v714, 4294901760
        %716 = vmatpush.msra.mxu0 %v715
        %v717 = vand.u32 %v259, 4294901760
        %718 = vmatmul.f32.gmra.mxu0 %v717
        %v719 = vpop.f32.mrf.mxu0
        %v720 = vadd.f32 %v681, %v719
        %v721 = vand.u32 %v262, 4294901760
        %722 = vmatmul.f32.gmra.mxu0 %v721
        %v723 = vpop.f32.mrf.mxu0
        %v724 = vadd.f32 %v689, %v723
        %725 = vdwg.mxu0
        %726 = vmatpush.msra.mxu0 0.0
        %727 = vmatpush.msra.mxu0 0.0
        %728 = vmatpush.msra.mxu0 0.0
        %729 = vmatpush.msra.mxu0 0.0
        %730 = vmatpush.msra.mxu0 0.0
        %731 = vmatpush.msra.mxu0 0.0
        %732 = vmatpush.msra.mxu0 0.0
        %733 = vmatpush.msra.mxu0 0.0
        %734 = vmatpush.msra.mxu0 0.0
        %735 = vmatpush.msra.mxu0 0.0
        %736 = vmatpush.msra.mxu0 0.0
        %737 = vmatpush.msra.mxu0 0.0
        %738 = vmatpush.msra.mxu0 0.0
        %739 = vmatpush.msra.mxu0 0.0
        %v740 = vand.u32 %v655, 4294901760
        %v741 = vsub.f32 %v655, %v740
        %742 = vmatpush.msra.mxu0 %v741
        %v743 = vand.u32 %v654, 4294901760
        %v744 = vsub.f32 %v654, %v743
        %745 = vmatpush.msra.mxu0 %v744
        %v746 = vand.u32 %v259, 4294901760
        %v747 = vsub.f32 %v259, %v746
        %748 = vmatmul.f32.gmra.mxu0 %v747
        %v749 = vpop.f32.mrf.mxu0
        %v750 = vadd.f32 %v720, %v749
        %v751 = vand.u32 %v262, 4294901760
        %v752 = vsub.f32 %v262, %v751
        %753 = vmatmul.f32.gmra.mxu0 %v752
        %v754 = vpop.f32.mrf.mxu0
        %v755 = vadd.f32 %v724, %v754
        %756 = vdwg.mxu0
        %757 = vmatpush.msra.mxu0 0.0
        %758 = vmatpush.msra.mxu0 0.0
        %759 = vmatpush.msra.mxu0 0.0
        %760 = vmatpush.msra.mxu0 0.0
        %761 = vmatpush.msra.mxu0 0.0
        %762 = vmatpush.msra.mxu0 0.0
        %763 = vmatpush.msra.mxu0 0.0
        %764 = vmatpush.msra.mxu0 0.0
        %765 = vmatpush.msra.mxu0 0.0
        %766 = vmatpush.msra.mxu0 0.0
        %767 = vmatpush.msra.mxu0 0.0
        %768 = vmatpush.msra.mxu0 0.0
        %769 = vmatpush.msra.mxu0 0.0
        %770 = vmatpush.msra.mxu0 0.0
        %v771 = vand.u32 %v655, 4294901760
        %772 = vmatpush.msra.mxu0 %v771
        %v773 = vand.u32 %v654, 4294901760
        %774 = vmatpush.msra.mxu0 %v773
        %v775 = vand.u32 %v259, 4294901760
        %v776 = vsub.f32 %v259, %v775
        %v777 = vand.u32 %v776, 4294901760
        %778 = vmatmul.f32.gmra.mxu0 %v777
        %v779 = vpop.f32.mrf.mxu0
        %v780 = vadd.f32 %v750, %v779
        %v781 = vand.u32 %v262, 4294901760
        %v782 = vsub.f32 %v262, %v781
        %v783 = vand.u32 %v782, 4294901760
        %784 = vmatmul.f32.gmra.mxu0 %v783
        %v785 = vpop.f32.mrf.mxu0
        %v786 = vadd.f32 %v755, %v785
        %787 = vdwg.mxu0
        %788 = vmatpush.msra.mxu0 0.0
        %789 = vmatpush.msra.mxu0 0.0
        %790 = vmatpush.msra.mxu0 0.0
        %791 = vmatpush.msra.mxu0 0.0
        %792 = vmatpush.msra.mxu0 0.0
        %793 = vmatpush.msra.mxu0 0.0
        %794 = vmatpush.msra.mxu0 0.0
        %795 = vmatpush.msra.mxu0 0.0
        %796 = vmatpush.msra.mxu0 0.0
        %797 = vmatpush.msra.mxu0 0.0
        %798 = vmatpush.msra.mxu0 0.0
        %799 = vmatpush.msra.mxu0 0.0
        %800 = vmatpush.msra.mxu0 0.0
        %801 = vmatpush.msra.mxu0 0.0
        %v802 = vand.u32 %v655, 4294901760
        %v803 = vsub.f32 %v655, %v802
        %v804 = vand.u32 %v803, 4294901760
        %805 = vmatpush.msra.mxu0 %v804
        %v806 = vand.u32 %v654, 4294901760
        %v807 = vsub.f32 %v654, %v806
        %v808 = vand.u32 %v807, 4294901760
        %809 = vmatpush.msra.mxu0 %v808
        %v810 = vand.u32 %v259, 4294901760
        %811 = vmatmul.f32.gmra.mxu0 %v810
        %v812 = vpop.f32.mrf.mxu0
        %v813 = vadd.f32 %v780, %v812
        %v814 = vand.u32 %v262, 4294901760
        %815 = vmatmul.f32.gmra.mxu0 %v814
        %v816 = vpop.f32.mrf.mxu0
        %v817 = vadd.f32 %v786, %v816
        %818 = vdwg.mxu0
        %819 = vmatpush.msra.mxu0 0.0
        %820 = vmatpush.msra.mxu0 0.0
        %821 = vmatpush.msra.mxu0 0.0
        %822 = vmatpush.msra.mxu0 0.0
        %823 = vmatpush.msra.mxu0 0.0
        %824 = vmatpush.msra.mxu0 0.0
        %825 = vmatpush.msra.mxu0 0.0
        %826 = vmatpush.msra.mxu0 0.0
        %827 = vmatpush.msra.mxu0 0.0
        %828 = vmatpush.msra.mxu0 0.0
        %829 = vmatpush.msra.mxu0 0.0
        %830 = vmatpush.msra.mxu0 0.0
        %831 = vmatpush.msra.mxu0 0.0
        %832 = vmatpush.msra.mxu0 0.0
        %v833 = vand.u32 %v655, 4294901760
        %834 = vmatpush.msra.mxu0 %v833
        %v835 = vand.u32 %v654, 4294901760
        %836 = vmatpush.msra.mxu0 %v835
        %v837 = vand.u32 %v259, 4294901760
        %838 = vmatmul.f32.gmra.mxu0 %v837
        %v839 = vpop.f32.mrf.mxu0
        %v840 = vadd.f32 %v813, %v839
        %v841 = vand.u32 %v262, 4294901760
        %842 = vmatmul.f32.gmra.mxu0 %v841
        %v843 = vpop.f32.mrf.mxu0
        %v844 = vadd.f32 %v817, %v843
        %845 = vdwg.mxu0
        %v847 = vsel %vm257, %v840, 0
        %v850 = vsel %vm257, %v844, 0
        %852 = vmatpush.msra.mxu0 0.0
        %853 = vmatpush.msra.mxu0 0.0
        %854 = vmatpush.msra.mxu0 0.0
        %855 = vmatpush.msra.mxu0 0.0
        %856 = vmatpush.msra.mxu0 0.0
        %857 = vmatpush.msra.mxu0 0.0
        %858 = vmatpush.msra.mxu0 0.0
        %859 = vmatpush.msra.mxu0 0.0
        %860 = vmatpush.msra.mxu0 0.0
        %861 = vmatpush.msra.mxu0 0.0
        %862 = vmatpush.msra.mxu0 0.0
        %863 = vmatpush.msra.mxu0 0.0
        %864 = vmatpush.msra.mxu0 0.0
        %865 = vmatpush.msra.mxu0 0.0
        %v866 = vand.u32 %v254, 4294901760
        %867 = vmatpush.msra.mxu0 %v866
        %v868 = vand.u32 %v253, 4294901760
        %869 = vmatpush.msra.mxu0 %v868
        %v870 = vand.u32 %v847, 4294901760
        %v871 = vsub.f32 %v847, %v870
        %v872 = vand.u32 %v871, 4294901760
        %v873 = vsub.f32 %v871, %v872
        %v874 = vand.u32 %v873, 4294901760
        %875 = vmatmul.f32.gmra.mxu0 %v874
        %v876 = vpop.f32.mrf.mxu0
        %v877 = vadd.f32 0.0, %v876
        %v878 = vand.u32 %v850, 4294901760
        %v879 = vsub.f32 %v850, %v878
        %v880 = vand.u32 %v879, 4294901760
        %v881 = vsub.f32 %v879, %v880
        %v882 = vand.u32 %v881, 4294901760
        %883 = vmatmul.f32.gmra.mxu0 %v882
        %v884 = vpop.f32.mrf.mxu0
        %v885 = vadd.f32 0.0, %v884
        %886 = vdwg.mxu0
        %887 = vmatpush.msra.mxu0 0.0
        %888 = vmatpush.msra.mxu0 0.0
        %889 = vmatpush.msra.mxu0 0.0
        %890 = vmatpush.msra.mxu0 0.0
        %891 = vmatpush.msra.mxu0 0.0
        %892 = vmatpush.msra.mxu0 0.0
        %893 = vmatpush.msra.mxu0 0.0
        %894 = vmatpush.msra.mxu0 0.0
        %895 = vmatpush.msra.mxu0 0.0
        %896 = vmatpush.msra.mxu0 0.0
        %897 = vmatpush.msra.mxu0 0.0
        %898 = vmatpush.msra.mxu0 0.0
        %899 = vmatpush.msra.mxu0 0.0
        %900 = vmatpush.msra.mxu0 0.0
        %v901 = vand.u32 %v254, 4294901760
        %v902 = vsub.f32 %v254, %v901
        %v903 = vand.u32 %v902, 4294901760
        %v904 = vsub.f32 %v902, %v903
        %v905 = vand.u32 %v904, 4294901760
        %906 = vmatpush.msra.mxu0 %v905
        %v907 = vand.u32 %v253, 4294901760
        %v908 = vsub.f32 %v253, %v907
        %v909 = vand.u32 %v908, 4294901760
        %v910 = vsub.f32 %v908, %v909
        %v911 = vand.u32 %v910, 4294901760
        %912 = vmatpush.msra.mxu0 %v911
        %v913 = vand.u32 %v847, 4294901760
        %914 = vmatmul.f32.gmra.mxu0 %v913
        %v915 = vpop.f32.mrf.mxu0
        %v916 = vadd.f32 %v877, %v915
        %v917 = vand.u32 %v850, 4294901760
        %918 = vmatmul.f32.gmra.mxu0 %v917
        %v919 = vpop.f32.mrf.mxu0
        %v920 = vadd.f32 %v885, %v919
        %921 = vdwg.mxu0
        %922 = vmatpush.msra.mxu0 0.0
        %923 = vmatpush.msra.mxu0 0.0
        %924 = vmatpush.msra.mxu0 0.0
        %925 = vmatpush.msra.mxu0 0.0
        %926 = vmatpush.msra.mxu0 0.0
        %927 = vmatpush.msra.mxu0 0.0
        %928 = vmatpush.msra.mxu0 0.0
        %929 = vmatpush.msra.mxu0 0.0
        %930 = vmatpush.msra.mxu0 0.0
        %931 = vmatpush.msra.mxu0 0.0
        %932 = vmatpush.msra.mxu0 0.0
        %933 = vmatpush.msra.mxu0 0.0
        %934 = vmatpush.msra.mxu0 0.0
        %935 = vmatpush.msra.mxu0 0.0
        %v936 = vand.u32 %v254, 4294901760
        %v937 = vsub.f32 %v254, %v936
        %938 = vmatpush.msra.mxu0 %v937
        %v939 = vand.u32 %v253, 4294901760
        %v940 = vsub.f32 %v253, %v939
        %941 = vmatpush.msra.mxu0 %v940
        %v942 = vand.u32 %v847, 4294901760
        %v943 = vsub.f32 %v847, %v942
        %944 = vmatmul.f32.gmra.mxu0 %v943
        %v945 = vpop.f32.mrf.mxu0
        %v946 = vadd.f32 %v916, %v945
        %v947 = vand.u32 %v850, 4294901760
        %v948 = vsub.f32 %v850, %v947
        %949 = vmatmul.f32.gmra.mxu0 %v948
        %v950 = vpop.f32.mrf.mxu0
        %v951 = vadd.f32 %v920, %v950
        %952 = vdwg.mxu0
        %953 = vmatpush.msra.mxu0 0.0
        %954 = vmatpush.msra.mxu0 0.0
        %955 = vmatpush.msra.mxu0 0.0
        %956 = vmatpush.msra.mxu0 0.0
        %957 = vmatpush.msra.mxu0 0.0
        %958 = vmatpush.msra.mxu0 0.0
        %959 = vmatpush.msra.mxu0 0.0
        %960 = vmatpush.msra.mxu0 0.0
        %961 = vmatpush.msra.mxu0 0.0
        %962 = vmatpush.msra.mxu0 0.0
        %963 = vmatpush.msra.mxu0 0.0
        %964 = vmatpush.msra.mxu0 0.0
        %965 = vmatpush.msra.mxu0 0.0
        %966 = vmatpush.msra.mxu0 0.0
        %v967 = vand.u32 %v254, 4294901760
        %968 = vmatpush.msra.mxu0 %v967
        %v969 = vand.u32 %v253, 4294901760
        %970 = vmatpush.msra.mxu0 %v969
        %v971 = vand.u32 %v847, 4294901760
        %v972 = vsub.f32 %v847, %v971
        %v973 = vand.u32 %v972, 4294901760
        %974 = vmatmul.f32.gmra.mxu0 %v973
        %v975 = vpop.f32.mrf.mxu0
        %v976 = vadd.f32 %v946, %v975
        %v977 = vand.u32 %v850, 4294901760
        %v978 = vsub.f32 %v850, %v977
        %v979 = vand.u32 %v978, 4294901760
        %980 = vmatmul.f32.gmra.mxu0 %v979
        %v981 = vpop.f32.mrf.mxu0
        %v982 = vadd.f32 %v951, %v981
        %983 = vdwg.mxu0
        %984 = vmatpush.msra.mxu0 0.0
        %985 = vmatpush.msra.mxu0 0.0
        %986 = vmatpush.msra.mxu0 0.0
        %987 = vmatpush.msra.mxu0 0.0
        %988 = vmatpush.msra.mxu0 0.0
        %989 = vmatpush.msra.mxu0 0.0
        %990 = vmatpush.msra.mxu0 0.0
        %991 = vmatpush.msra.mxu0 0.0
        %992 = vmatpush.msra.mxu0 0.0
        %993 = vmatpush.msra.mxu0 0.0
        %994 = vmatpush.msra.mxu0 0.0
        %995 = vmatpush.msra.mxu0 0.0
        %996 = vmatpush.msra.mxu0 0.0
        %997 = vmatpush.msra.mxu0 0.0
        %v998 = vand.u32 %v254, 4294901760
        %v999 = vsub.f32 %v254, %v998
        %v1000 = vand.u32 %v999, 4294901760
        %1001 = vmatpush.msra.mxu0 %v1000
        %v1002 = vand.u32 %v253, 4294901760
        %v1003 = vsub.f32 %v253, %v1002
        %v1004 = vand.u32 %v1003, 4294901760
        %1005 = vmatpush.msra.mxu0 %v1004
        %v1006 = vand.u32 %v847, 4294901760
        %1007 = vmatmul.f32.gmra.mxu0 %v1006
        %v1008 = vpop.f32.mrf.mxu0
        %v1009 = vadd.f32 %v976, %v1008
        %v1010 = vand.u32 %v850, 4294901760
        %1011 = vmatmul.f32.gmra.mxu0 %v1010
        %v1012 = vpop.f32.mrf.mxu0
        %v1013 = vadd.f32 %v982, %v1012
        %1014 = vdwg.mxu0
        %1015 = vmatpush.msra.mxu0 0.0
        %1016 = vmatpush.msra.mxu0 0.0
        %1017 = vmatpush.msra.mxu0 0.0
        %1018 = vmatpush.msra.mxu0 0.0
        %1019 = vmatpush.msra.mxu0 0.0
        %1020 = vmatpush.msra.mxu0 0.0
        %1021 = vmatpush.msra.mxu0 0.0
        %1022 = vmatpush.msra.mxu0 0.0
        %1023 = vmatpush.msra.mxu0 0.0
        %1024 = vmatpush.msra.mxu0 0.0
        %1025 = vmatpush.msra.mxu0 0.0
        %1026 = vmatpush.msra.mxu0 0.0
        %1027 = vmatpush.msra.mxu0 0.0
        %1028 = vmatpush.msra.mxu0 0.0
        %v1029 = vand.u32 %v254, 4294901760
        %1030 = vmatpush.msra.mxu0 %v1029
        %v1031 = vand.u32 %v253, 4294901760
        %1032 = vmatpush.msra.mxu0 %v1031
        %v1033 = vand.u32 %v847, 4294901760
        %1034 = vmatmul.f32.gmra.mxu0 %v1033
        %v1035 = vpop.f32.mrf.mxu0
        %v1036 = vadd.f32 %v1009, %v1035
        %v1037 = vand.u32 %v850, 4294901760
        %1038 = vmatmul.f32.gmra.mxu0 %v1037
        %v1039 = vpop.f32.mrf.mxu0
        %v1040 = vadd.f32 %v1013, %v1039
        %1041 = vdwg.mxu0
        %s1042 = scalar_lea.vmem %s246, 16 [#allocation8]
        %1043 = vst.msk [vmem:[%s1042] sm:$0xff] %vm650, %v1036
        %1044 = vst.msk [vmem:[%s1042 + $0x8] sm:$0xff] %vm650, %v1040
        %s1045 = sand.u32 %s116, 1
        %s1046 = scalar_lea.sflag [#allocation4], %s1045
        %s1047 = sand.u32 %s116, 1
        %s1048 = smul.addr %s1047, 32
        %s1049 = scalar_lea.vmem [#allocation8], %s1048
        // Predicated region
        $region45: #{run.1} parent=31 // pred_check
          %p1050 = pneg %p126
        $region46: #{run.1} parent=31 // pred_check_branch
          %1052 = sbr.rel (%p1050) target = $region48
        $region47: #{run.1} parent=31 // pred_region
          #allocation10 [shape = 'u32[6]{0}', space=smem, size = 0x18, scoped, tag = 'DMA stride descriptor']
          %s1053 = smul.u32 2, %s25
          %s1054 = smul.u32 2, %s26
          %1056 = vsyncadd %s1046, 0
          %s1057 = smul.addr %s1053, 4
          %s1058 = sadd.s32 %s1054, %s1057
          %s1059 = smul.addr %s1058, 8
          %s1060 = scalar_lea.hbm %s3, %s1059
          %s1062 = sshll.u32 1, 14
          %s1063 = sxor.u32 4294967295, %s1062
          %s1066 = sshll.u32 7, 18
          %s1067 = sxor.u32 4294967295, %s1066
          %s1068 = sand.u32 0, %s1067
          %s1070 = sor.u32 %s1068, 0
          %s1071 = sshll.u32 %s1049, 4
          %s1072 = int_to_ptr.vmem [resolvable:$true] %s1071
          %s1073 = sshll.u32 %s1060, 4
          %s1074 = int_to_ptr.hbm [resolvable:$true] %s1073
          %1080 = sst [smem:[#allocation10]] 256
          %s1081 = scalar_lea.smem [#allocation10], 1
          %1082 = sst [smem:[%s1081]] 512
          %s1083 = scalar_lea.smem [#allocation10], 2
          %1084 = sst [smem:[%s1083]] 2
          %s1085 = scalar_lea.smem [#allocation10], 3
          %1086 = sst [smem:[%s1085]] 128
          %s1087 = scalar_lea.smem [#allocation10], 4
          %1088 = sst [smem:[%s1087]] 128
          %s1089 = scalar_lea.smem [#allocation10], 5
          %1090 = sst [smem:[%s1089]] 8
          %1092 = dma.general %s1072, 512, %s1074, %s1046, [#allocation9], [#allocation10], %s1070, 0
        $region48: #{run.1} parent=31 // pred_fallthru
          _
      $region32: #{run.1} parent=5 // pred_fallthru
        _
      %p1093 = scmp.le.s32.totalorder 2, %s16
      // Predicated region
      $region49: #{run.1} parent=5 // pred_check
        %p1094 = pneg %p1093
      $region50: #{run.1} parent=5 // pred_check_branch
        %1096 = sbr.rel (%p1094) target = $region52
      $region51: #{run.1} parent=5 // pred_region
        %s1097 = ssub.s32 %s16, 2
        // Predicated region
        $region53: #{run.1} parent=51 // pred_check
          %p1098 = pneg %p132
        $region54: #{run.1} parent=51 // pred_check_branch
          %1100 = sbr.rel (%p1098) target = $region56
        $region55: #{run.1} parent=51 // pred_region
          %s1101 = sand.u32 %s117, 1
          %s1102 = scalar_lea.sflag [#allocation4], %s1101
          %s1103 = sand.u32 %s117, 1
          %s1104 = smul.addr %s1103, 32
          %s1105 = scalar_lea.vmem [#allocation8], %s1104
          %1107 = dma.done %s1102, 512
        $region56: #{run.1} parent=51 // pred_fallthru
          _
      $region52: #{run.1} parent=5 // pred_fallthru
        _
    $region6: #{run.1} parent=1 // loop_footer
      %s20 = sadd.s32 1, %s16
    $region7: #{run.1} parent=1 // loop_footer_branch
      %15 = sbr.rel target = $region3
    $region8: #{run.1} parent=1 // loop_exit
      _
    %1108 = vsyncpa [#allocation3], 1
    %s1109 = scalar_lea.sflag [#allocation3], 1
    %1110 = vsyncpa %s1109, 1
    %1111 = vsyncpa [#allocation6], 1
    %1112 = vsyncpa [#allocation4], 1
    %s1113 = scalar_lea.sflag [#allocation4], 1
    %1114 = vsyncpa %s1113, 1

</llo_original>
